<compile_context>
chip_gen: v5e
topology: v5e:2x2
jax: 0.10.0
libtpu: 0.0.40
codegen_flags: <defaults>
</compile_context>

<pallas_src>
import jax
import jax.numpy as jnp
from jax.experimental import pallas as pl
from jax.experimental.pallas import tpu as pltpu


def _round_up(x: int, m: int) -> int:
    return ((x + m - 1) // m) * m


def mylinear_kernel(x_ref, w_ref, b_ref, o_ref, acc_ref):
    k = pl.program_id(2)

    @pl.when(k == 0)
    def _init():
        acc_ref[...] = jnp.zeros_like(acc_ref)

    # MXU matmul, f32 accumulation in the VMEM scratch.
    acc_ref[...] += jnp.dot(
        x_ref[...], w_ref[...], preferred_element_type=jnp.float32
    )

    # Epilogue (bias + relu + cast + store) only once, on the last K step.
    @pl.when(k == pl.num_programs(2) - 1)
    def _finalize():
        out = acc_ref[...] + b_ref[...].astype(jnp.float32)  # (1, tn) broadcast
        o_ref[...] = jnp.maximum(out, 0.0).astype(o_ref.dtype)


def _pipeline_vmem_bytes(tm, tn, tk, x_dt, w_dt, b_dt, out_dt, nbuf):
    it = lambda d: jnp.dtype(d).itemsize
    return (
        nbuf * tm * tk * it(x_dt)        # X tiles
        + nbuf * tk * tn * it(w_dt)      # W tiles
        + nbuf * tn * it(b_dt)           # bias tiles
        + 2 * tm * tn * it(out_dt)       # output tiles (double-buffered)
        + tm * tn * 4                    # f32 accumulator scratch
    )


def mylinear(
    x,
    weight,
    bias,
    *,
    tm=512,
    tn=1024,
    tk=1024,
    compute_dtype=jnp.bfloat16,
    out_dtype=None,
    buffer_count=None,
):
    batch, in_units = x.shape
    in_units_w, units = weight.shape
    assert in_units == in_units_w
    assert bias.shape == (units,)

    comp_dt = jnp.dtype(x.dtype if compute_dtype is None else compute_dtype)
    out_dt = jnp.dtype(x.dtype if out_dtype is None else out_dtype)
    nbuf = 2 if buffer_count is None else int(buffer_count)

    # bf16 packs 16 rows per vreg -> align the M (sublane) tile to 16.
    m_align = 16 if comp_dt.itemsize == 2 else 8

    # Clamp tiles to the (padded) problem size; keep lane-dense N/K tiles.
    tm = min(tm, _round_up(batch, m_align))
    tn = min(tn, _round_up(units, 128))
    tk = min(tk, _round_up(in_units, 128))

    # v7x has 2 TensorCores: if the M axis collapses to one block, make sure
    # the (parallel) N axis still has >= 2 blocks so both TCs get work.
    if (_round_up(batch, tm) // tm == 1
            and _round_up(units, tn) // tn == 1
            and units > 128):
        tn = max(128, _round_up((units + 1) // 2, 128))

    # Per-generation VMEM budget: query the chip, leave headroom (v7x = 64 MiB
    # per TC; v5e/v6e = 128 MiB). Shrink tiles until the double-buffered
    # working set fits comfortably.
    try:
        phys_vmem = int(pltpu.get_tpu_info().vmem_capacity_bytes)
    except Exception:
        phys_vmem = 64 << 20  # assume the smallest (v7x per-TC)
    budget = max(16 << 20, phys_vmem // 2 - (8 << 20))

    def _ws():
        return _pipeline_vmem_bytes(tm, tn, tk, comp_dt, comp_dt,
                                    bias.dtype, out_dt, nbuf)

    while _ws() > budget and tk > 512:
        tk = max(128, _round_up(tk // 2, 128))
    while _ws() > budget and tn > 256:
        tn = max(128, _round_up(tn // 2, 128))
    while _ws() > budget and tm > 128:
        tm = max(m_align, _round_up(tm // 2, m_align))

    Mp = _round_up(batch, tm)
    Np = _round_up(units, tn)
    Kp = _round_up(in_units, tk)

    # Pad only when needed (fast path when shapes are already tile multiples).
    # Zero K-padding keeps the matmul exact; padded M/N rows/cols are sliced off.
    if (Mp, Kp) == (batch, in_units):
        xp = x
    else:
        xp = jnp.zeros((Mp, Kp), x.dtype).at[:batch, :in_units].set(x)
    if xp.dtype != comp_dt:
        xp = xp.astype(comp_dt)

    if (Kp, Np) == (in_units, units):
        wp = weight
    else:
        wp = jnp.zeros((Kp, Np), weight.dtype).at[:in_units, :units].set(weight)
    if wp.dtype != comp_dt:
        wp = wp.astype(comp_dt)

    # Bias stays in its native (f32) dtype: it is added to the f32 accumulator.
    if Np == units:
        bp = bias.reshape(1, units)
    else:
        bp = jnp.zeros((1, Np), bias.dtype).at[0, :units].set(bias)

    grid = (Mp // tm, Np // tn, Kp // tk)

    itemsize = lambda a: jnp.dtype(a.dtype).itemsize
    cost = pl.CostEstimate(
        flops=2 * batch * units * in_units,
        transcendentals=0,
        bytes_accessed=(
            xp.size * itemsize(xp)
            + wp.size * itemsize(wp)
            + bp.size * itemsize(bp)
            + batch * units * out_dt.itemsize
        ),
    )

    # Explicit scoped-VMEM limit (v5e default is only 16 MiB; v6e/v7x 32 MiB).
    vmem_limit = int(min(max(32 << 20, 2 * _ws()), max(budget, 32 << 20)))

    if buffer_count is None:
        x_spec = pl.BlockSpec((tm, tk), lambda i, j, k: (i, k))
        w_spec = pl.BlockSpec((tk, tn), lambda i, j, k: (k, j))
    else:
        # Deeper buffering for DMA-exposed cases (short K / forced-small tiles).
        x_spec = pl.BlockSpec((tm, tk), lambda i, j, k: (i, k),
                              pipeline_mode=pl.Buffered(buffer_count))
        w_spec = pl.BlockSpec((tk, tn), lambda i, j, k: (k, j),
                              pipeline_mode=pl.Buffered(buffer_count))

    out_padded = pl.pallas_call(
        mylinear_kernel,
        out_shape=jax.ShapeDtypeStruct((Mp, Np), out_dt),
        grid_spec=pltpu.PrefetchScalarGridSpec(
            num_scalar_prefetch=0,
            grid=grid,
            in_specs=[
                x_spec,                                          # X tile
                w_spec,                                          # W tile
                pl.BlockSpec((1, tn), lambda i, j, k: (0, j)),   # bias tile
            ],
            out_specs=pl.BlockSpec((tm, tn), lambda i, j, k: (i, j)),
            scratch_shapes=[pltpu.VMEM((tm, tn), jnp.float32)],
        ),
        compiler_params=pltpu.CompilerParams(
            dimension_semantics=("parallel", "parallel", "arbitrary"),
            vmem_limit_bytes=vmem_limit,
        ),
        cost_estimate=cost,
    )(xp, wp, bp)

    if (Mp, Np) == (batch, units):
        return out_padded
    return out_padded[:batch, :units]


if __name__ == "__main__":
    key = jax.random.PRNGKey(0)
    k_x, k_w, k_b = jax.random.split(key, 3)

    # Small shapes consistent with the module's forward (X @ W + b, relu).
    batch, in_units, units = 8, 32, 128

    x = jax.random.normal(k_x, (batch, in_units), dtype=jnp.float32)
    # Module's __init__ uses torch.randn for both parameters.
    weight = jax.random.normal(k_w, (in_units, units), dtype=jnp.float32)
    bias = jax.random.normal(k_b, (units,), dtype=jnp.float32)

    ref = jnp.maximum(x @ weight + bias, 0.0)

    # Default fast path: bf16 operands into the MXU, f32 accumulation/output.
    out_bf16 = jax.block_until_ready(mylinear(x, weight, bias))
    assert out_bf16.shape == (batch, units)
    assert jnp.allclose(out_bf16, ref, atol=3e-1, rtol=3e-2)

    # Strict-numerics path: f32 operands, tight tolerance vs the JAX reference.
    out_f32 = jax.block_until_ready(
        mylinear(x, weight, bias, compute_dtype=jnp.float32)
    )
    assert out_f32.shape == (batch, units)
    assert jnp.allclose(out_f32, ref, atol=1e-5, rtol=1e-5)

    print("KERNEL_OK")
</pallas_src>

<mosaic_0001>
module attributes {stable_mosaic.version = 11 : i64} {
  func.func @mylinear_kernel(%arg0: i32, %arg1: i32, %arg2: i32, %arg3: memref<16x128xbf16, #tpu.memory_space<vmem>>, %arg4: memref<128x128xbf16, #tpu.memory_space<vmem>>, %arg5: memref<1x128xf32, #tpu.memory_space<vmem>>, %arg6: memref<16x128xf32, #tpu.memory_space<vmem>>, %arg7: memref<16x128xf32, #tpu.memory_space<vmem>>) attributes {dimension_semantics = [#tpu.dimension_semantics<parallel>, #tpu.dimension_semantics<parallel>, #tpu.dimension_semantics<arbitrary>], iteration_bounds = array<i64: 1, 1, 1>, scalar_prefetch = 0 : i64, scratch_operands = 1 : i64, tpu.core_type = #tpu.core_type<tc>, window_params = [{transform_indices = @transform_0, window_bounds = array<i64: 16, 128>}, {transform_indices = @transform_1, window_bounds = array<i64: 128, 128>}, {transform_indices = @transform_2, window_bounds = array<i64: 1, 128>}, {transform_indices = @transform_3, window_bounds = array<i64: 16, 128>}]} {
    %c0_i32 = arith.constant 0 : i32
    %0 = arith.cmpi eq, %arg2, %c0_i32 : i32
    %1 = arith.extui %0 : i1 to i32
    %c0_i32_0 = arith.constant 0 : i32
    %2 = arith.cmpi ne, %1, %c0_i32_0 : i32
    scf.if %2 {
      %cst_10 = arith.constant 0.000000e+00 : f32
      %12 = vector.broadcast %cst_10 : f32 to vector<16x128xf32>
      %c0_11 = arith.constant 0 : index
      %c0_12 = arith.constant 0 : index
      %13 = vector.load %arg7[%c0_11, %c0_12] : memref<16x128xf32, #tpu.memory_space<vmem>>, vector<16x128xf32>
      tpu.vector_store %arg7[%c0_11, %c0_12], %12 {strides = array<i32>} : memref<16x128xf32, #tpu.memory_space<vmem>>, vector<16x128xf32>,
    } else {
    }
    %c0 = arith.constant 0 : index
    %c0_1 = arith.constant 0 : index
    %3 = vector.load %arg7[%c0, %c0_1] : memref<16x128xf32, #tpu.memory_space<vmem>>, vector<16x128xf32>
    %c0_2 = arith.constant 0 : index
    %c0_3 = arith.constant 0 : index
    %4 = vector.load %arg3[%c0_2, %c0_3] : memref<16x128xbf16, #tpu.memory_space<vmem>>, vector<16x128xbf16>
    %c0_4 = arith.constant 0 : index
    %c0_5 = arith.constant 0 : index
    %5 = vector.load %arg4[%c0_4, %c0_5] : memref<128x128xbf16, #tpu.memory_space<vmem>>, vector<128x128xbf16>
    %cst = arith.constant dense<0.000000e+00> : vector<16x128xf32>
    %6 = tpu.matmul %4, %5, %cst {dimension_numbers = #tpu.dot_dimension_numbers<[1], [0], [0], [1], [0, 0, 1, 1], [], []>} : vector<16x128xbf16>, vector<128x128xbf16>, vector<16x128xf32> -> vector<16x128xf32>
    %7 = arith.addf %3, %6 : vector<16x128xf32>
    %c0_6 = arith.constant 0 : index
    %c0_7 = arith.constant 0 : index
    %8 = vector.load %arg7[%c0_6, %c0_7] : memref<16x128xf32, #tpu.memory_space<vmem>>, vector<16x128xf32>
    tpu.vector_store %arg7[%c0_6, %c0_7], %7 {strides = array<i32>} : memref<16x128xf32, #tpu.memory_space<vmem>>, vector<16x128xf32>,
    %c0_i32_8 = arith.constant 0 : i32
    %9 = arith.cmpi eq, %arg2, %c0_i32_8 : i32
    %10 = arith.extui %9 : i1 to i32
    %c0_i32_9 = arith.constant 0 : i32
    %11 = arith.cmpi ne, %10, %c0_i32_9 : i32
    scf.if %11 {
      %c0_10 = arith.constant 0 : index
      %c0_11 = arith.constant 0 : index
      %12 = vector.load %arg7[%c0_10, %c0_11] : memref<16x128xf32, #tpu.memory_space<vmem>>, vector<16x128xf32>
      %c0_12 = arith.constant 0 : index
      %c0_13 = arith.constant 0 : index
      %13 = vector.load %arg5[%c0_12, %c0_13] : memref<1x128xf32, #tpu.memory_space<vmem>>, vector<1x128xf32>
      %14 = vector.broadcast %13 : vector<1x128xf32> to vector<16x128xf32>
      %15 = arith.addf %12, %14 : vector<16x128xf32>
      %cst_14 = arith.constant 0.000000e+00 : f32
      %16 = vector.broadcast %cst_14 : f32 to vector<16x128xf32>
      %17 = arith.maximumf %15, %16 : vector<16x128xf32>
      %c0_15 = arith.constant 0 : index
      %c0_16 = arith.constant 0 : index
      %18 = vector.load %arg6[%c0_15, %c0_16] : memref<16x128xf32, #tpu.memory_space<vmem>>, vector<16x128xf32>
      tpu.vector_store %arg6[%c0_15, %c0_16], %17 {strides = array<i32>} : memref<16x128xf32, #tpu.memory_space<vmem>>, vector<16x128xf32>,
    } else {
    }
    return
  }
  func.func @transform_0(%arg0: i32, %arg1: i32, %arg2: i32) -> (i32, i32) {
    %c0_i32 = arith.constant 0 : i32
    return %arg0, %arg2 : i32, i32
  }
  func.func @transform_1(%arg0: i32, %arg1: i32, %arg2: i32) -> (i32, i32) {
    %c0_i32 = arith.constant 0 : i32
    return %arg2, %arg1 : i32, i32
  }
  func.func @transform_2(%arg0: i32, %arg1: i32, %arg2: i32) -> (i32, i32) {
    %c0_i32 = arith.constant 0 : i32
    %c0_i32_0 = arith.constant 0 : i32
    return %c0_i32, %arg1 : i32, i32
  }
  func.func @transform_3(%arg0: i32, %arg1: i32, %arg2: i32) -> (i32, i32) {
    %c0_i32 = arith.constant 0 : i32
    return %arg0, %arg1 : i32, i32
  }
}

</mosaic_0001>

<llo_original>
// kernel: tpu_custom_call.1
$region0: #{tpu_custom_call.1}
  #allocation0 [shape = 'u32[]', space=smem, size = 0x4, offset = 0x4, fixed_abs, tag = 'smem constant byte address 0x4 - core index']
  #allocation1 [shape = 'u32[72,128]{1,0:T(1,128)}', space=vmem, size = 0x9000, scoped, tag = 'internal scratch']
  #allocation2 [shape = 'f32[16,128]{1,0:T(8,128)}', space=vmem, size = 0x2000, scoped, tag = 'scratch operand']
  %s0 = inlined_call_operand.hbm [shape: bf16[16,128], index: 0, kind: input, shape index: {}]
  %s1 = inlined_call_operand.hbm [shape: bf16[128,128], index: 1, kind: input, shape index: {}]
  %s2 = inlined_call_operand.vmem [shape: f32[1,128], index: 2, kind: input, shape index: {}]
  %s3 = inlined_call_operand.hbm [shape: f32[16,128], index: 3, kind: output, shape index: {}]
  %s4 = sld [smem:[#allocation0]]
  $region38: #{tpu_custom_call.1} parent=0
    _
  %s6 = ssub.s32 1, %s4
  %s7 = scalar_select 0, %s6, %s4
  $region1: #{tpu_custom_call.1} parent=0
    #allocation3 [shape = 'u8[4096]{0}', space=vmem, size = 0x1000, scoped, tag = 'input window, operand 0, single buffered']
    #allocation4 [shape = 's32[1]{0}', space=sflag, size = 0x4, scoped, tag = 'scoped memory for tpu_custom_call.1']
    #allocation5 [shape = 's32[1]{0}', space=sflag, size = 0x4, scoped, tag = 'scoped memory for tpu_custom_call.1']
    #allocation6 [shape = 'u8[32768]{0}', space=vmem, size = 0x8000, scoped, tag = 'input window, operand 1, single buffered']
    #allocation7 [shape = 's32[1]{0}', space=sflag, size = 0x4, scoped, tag = 'scoped memory for tpu_custom_call.1']
    #allocation8 [shape = 'u8[8192]{0}', space=vmem, size = 0x2000, scoped, tag = 'output window, operand 0, single buffered']
    %8 = vsyncpa [#allocation4], 0
    %9 = vsyncpa [#allocation7], 0
    %10 = vsyncpa [#allocation5], 0
    // Predicated region
    $region2: #{tpu_custom_call.1} parent=1 // pred_check
      _
    $region3: #{tpu_custom_call.1} parent=1 // pred_check_branch
      %12 = sbr.rel (0) target = $region5
    $region4: #{tpu_custom_call.1} parent=1 // pred_region
      %14 = vsyncadd [#allocation4], 0
      %s15 = sshll.u32 %s0, 4
      %s16 = int_to_ptr.hbm [resolvable:$true] %s15
      %s17 = sshll.u32 [#allocation3], 4
      %s18 = int_to_ptr.vmem [resolvable:$true] %s17
      %23 = dma.hbm_to_vmem [thread:$0]  %s16, 128, %s18, [#allocation4], 64, 64, 4
    $region5: #{tpu_custom_call.1} parent=1 // pred_fallthru
      _
    // Predicated region
    $region6: #{tpu_custom_call.1} parent=1 // pred_check
      _
    $region7: #{tpu_custom_call.1} parent=1 // pred_check_branch
      %25 = sbr.rel (0) target = $region9
    $region8: #{tpu_custom_call.1} parent=1 // pred_region
      %27 = vsyncadd [#allocation7], 0
      %s28 = sshll.u32 %s1, 4
      %s29 = int_to_ptr.hbm [resolvable:$true] %s28
      %s30 = sshll.u32 [#allocation6], 4
      %s31 = int_to_ptr.vmem [resolvable:$true] %s30
      %36 = dma.hbm_to_vmem [thread:$0]  %s29, 1024, %s31, [#allocation7], 64, 64, 4
    $region9: #{tpu_custom_call.1} parent=1 // pred_fallthru
      _
    // Predicated region
    $region10: #{tpu_custom_call.1} parent=1 // pred_check
      _
    $region11: #{tpu_custom_call.1} parent=1 // pred_check_branch
      %38 = sbr.rel (0) target = $region13
    $region12: #{tpu_custom_call.1} parent=1 // pred_region
      _
    $region13: #{tpu_custom_call.1} parent=1 // pred_fallthru
      _
    // Predicated region
    $region14: #{tpu_custom_call.1} parent=1 // pred_check
      _
    $region15: #{tpu_custom_call.1} parent=1 // pred_check_branch
      %40 = sbr.rel (0) target = $region17
    $region16: #{tpu_custom_call.1} parent=1 // pred_region
      %42 = dma.done [#allocation4], 128
    $region17: #{tpu_custom_call.1} parent=1 // pred_fallthru
      _
    // Predicated region
    $region18: #{tpu_custom_call.1} parent=1 // pred_check
      _
    $region19: #{tpu_custom_call.1} parent=1 // pred_check_branch
      %44 = sbr.rel (0) target = $region21
    $region20: #{tpu_custom_call.1} parent=1 // pred_region
      %46 = dma.done [#allocation7], 1024
    $region21: #{tpu_custom_call.1} parent=1 // pred_fallthru
      _
    %p47 = scmp.eq.s32.totalorder 0, 0
    // Predicated region
    $region22: #{tpu_custom_call.1} parent=1 // pred_check
      %p48 = pneg %p47
    $region23: #{tpu_custom_call.1} parent=1 // pred_check_branch
      %50 = sbr.rel (%p48) target = $region25
    $region24: #{tpu_custom_call.1} parent=1 // pred_region
      %51 = vst [vmem:[#allocation2] sm:$0xff] 0.0
      %52 = vst [vmem:[#allocation2 + $0x8] sm:$0xff] 0.0
    $region25: #{tpu_custom_call.1} parent=1 // pred_fallthru
      _
    %v53 = vld [vmem:[#allocation2] sm:$0xff]
    %v54 = vld [vmem:[#allocation2 + $0x8] sm:$0xff]
    %v55 = vld [vmem:[#allocation3] sm:$0xf]
    %v56 = vld [vmem:[#allocation3 + $0x4] sm:$0xf]
    %v57 = vld [vmem:[#allocation6] sm:$0xf]
    %v58 = vld [vmem:[#allocation6 + $0x4] sm:$0xf]
    %v59 = vld [vmem:[#allocation6 + $0x8] sm:$0xf]
    %v60 = vld [vmem:[#allocation6 + $0xc] sm:$0xf]
    %v61 = vld [vmem:[#allocation6 + $0x10] sm:$0xf]
    %v62 = vld [vmem:[#allocation6 + $0x14] sm:$0xf]
    %v63 = vld [vmem:[#allocation6 + $0x18] sm:$0xf]
    %v64 = vld [vmem:[#allocation6 + $0x1c] sm:$0xf]
    %v65 = vld [vmem:[#allocation6 + $0x20] sm:$0xf]
    %v66 = vld [vmem:[#allocation6 + $0x24] sm:$0xf]
    %v67 = vld [vmem:[#allocation6 + $0x28] sm:$0xf]
    %v68 = vld [vmem:[#allocation6 + $0x2c] sm:$0xf]
    %v69 = vld [vmem:[#allocation6 + $0x30] sm:$0xf]
    %v70 = vld [vmem:[#allocation6 + $0x34] sm:$0xf]
    %v71 = vld [vmem:[#allocation6 + $0x38] sm:$0xf]
    %v72 = vld [vmem:[#allocation6 + $0x3c] sm:$0xf]
    %v75 = vunpack.c.l.b16 %v55
    %v76 = vunpack.c.l.b16 %v56
    %v77 = vpack.c.b16 %v76, %v75
    %v95 = vunpack.c.l.b16 %v57
    %v96 = vunpack.c.l.b16 %v58
    %v97 = vunpack.c.l.b16 %v59
    %v98 = vunpack.c.l.b16 %v60
    %v99 = vunpack.c.l.b16 %v61
    %v100 = vunpack.c.l.b16 %v62
    %v101 = vunpack.c.l.b16 %v63
    %v102 = vunpack.c.l.b16 %v64
    %v103 = vunpack.c.l.b16 %v65
    %v104 = vunpack.c.l.b16 %v66
    %v105 = vunpack.c.l.b16 %v67
    %v106 = vunpack.c.l.b16 %v68
    %v107 = vunpack.c.l.b16 %v69
    %v108 = vunpack.c.l.b16 %v70
    %v109 = vunpack.c.l.b16 %v71
    %v110 = vunpack.c.l.b16 %v72
    %v111 = vpack.c.b16 %v96, %v95
    %v112 = vpack.c.b16 %v98, %v97
    %v113 = vpack.c.b16 %v100, %v99
    %v114 = vpack.c.b16 %v102, %v101
    %v115 = vpack.c.b16 %v104, %v103
    %v116 = vpack.c.b16 %v106, %v105
    %v117 = vpack.c.b16 %v108, %v107
    %v118 = vpack.c.b16 %v110, %v109
    %127 = vmatpush.bf16.msra.mxu0 %v118
    %128 = vmatpush.bf16.msra.mxu0 %v117
    %129 = vmatpush.bf16.msra.mxu0 %v116
    %130 = vmatpush.bf16.msra.mxu0 %v115
    %131 = vmatpush.bf16.msra.mxu0 %v114
    %132 = vmatpush.bf16.msra.mxu0 %v113
    %133 = vmatpush.bf16.msra.mxu0 %v112
    %134 = vmatpush.bf16.msra.mxu0 %v111
    %135 = vmatmul.bf16.gmra.mxu0 %v77
    %v136 = vpop.f32.mrf.mxu0
    %v137 = vadd.f32 0.0, %v136
    %v138 = vpop.f32.mrf.mxu0
    %v139 = vadd.f32 0.0, %v138
    %140 = vdwg.mxu0
    %v141 = vadd.f32 %v53, %v137
    %v142 = vadd.f32 %v54, %v139
    %143 = vst [vmem:[#allocation2] sm:$0xff] %v141
    %144 = vst [vmem:[#allocation2 + $0x8] sm:$0xff] %v142
    // Predicated region
    $region26: #{tpu_custom_call.1} parent=1 // pred_check
      %p145 = pneg %p47
    $region27: #{tpu_custom_call.1} parent=1 // pred_check_branch
      %147 = sbr.rel (%p145) target = $region29
    $region28: #{tpu_custom_call.1} parent=1 // pred_region
      %v148 = vld [vmem:[#allocation2] sm:$0xff]
      %v149 = vld [vmem:[#allocation2 + $0x8] sm:$0xff]
      %v150 = vld [vmem:[%s2] sm:$0x1]
      %v152 = vperm.slane %v150, 0
      %v154 = vadd.f32 %v148, %v152
      %v155 = vadd.f32 %v149, %v152
      %v156 = vmax.f32 %v154, 0.0
      %v157 = vmax.f32 %v155, 0.0
      %158 = vst [vmem:[#allocation8] sm:$0xff] %v156
      %159 = vst [vmem:[#allocation8 + $0x8] sm:$0xff] %v157
    $region29: #{tpu_custom_call.1} parent=1 // pred_fallthru
      _
    // Predicated region
    $region30: #{tpu_custom_call.1} parent=1 // pred_check
      _
    $region31: #{tpu_custom_call.1} parent=1 // pred_check_branch
      %161 = sbr.rel (0) target = $region33
    $region32: #{tpu_custom_call.1} parent=1 // pred_region
      %163 = vsyncadd [#allocation5], 0
      %s164 = sshll.u32 [#allocation8], 4
      %s165 = int_to_ptr.vmem [resolvable:$true] %s164
      %s166 = sshll.u32 %s3, 4
      %s167 = int_to_ptr.hbm [resolvable:$true] %s166
      %172 = dma.vmem_to_hbm [thread:$0]  %s165, 256, %s167, [#allocation5], 128, 128, 8
    $region33: #{tpu_custom_call.1} parent=1 // pred_fallthru
      _
    // Predicated region
    $region34: #{tpu_custom_call.1} parent=1 // pred_check
      _
    $region35: #{tpu_custom_call.1} parent=1 // pred_check_branch
      %174 = sbr.rel (0) target = $region37
    $region36: #{tpu_custom_call.1} parent=1 // pred_region
      %176 = dma.done [#allocation5], 256
    $region37: #{tpu_custom_call.1} parent=1 // pred_fallthru
      _
    %177 = vsyncpa [#allocation4], 1
    %178 = vsyncpa [#allocation7], 1
    %179 = vsyncpa [#allocation5], 1

</llo_original>
